<compile_context>
chip_gen: v5e
topology: v5e:2x2
jax: 0.10.0
libtpu: 0.0.40
codegen_flags: <defaults>
</compile_context>

<pallas_src>
import math

import jax
import jax.numpy as jnp
from jax.experimental import pallas as pl
from jax.experimental.pallas import tpu as pltpu


def _build_pe(d_model: int, max_len: int = 5000, dtype=jnp.float32) -> jnp.ndarray:
    """Deterministic sinusoidal table, shape (max_len, 1, d_model).

    Build it once in the activation dtype so the kernel streams it as-is.
    """
    assert d_model % 2 == 0, "PositionalEncoding requires an even d_model"
    position = jnp.arange(0, max_len, dtype=jnp.float32)[:, None]            # (L, 1)
    div_term = jnp.exp(
        jnp.arange(0, d_model, 2, dtype=jnp.float32)
        * (-(math.log(10000.0) / d_model))
    )                                                                         # (D/2,)
    angles = position * div_term                                              # (L, D/2)
    pe = jnp.zeros((max_len, d_model), dtype=jnp.float32)
    pe = pe.at[:, 0::2].set(jnp.sin(angles))
    pe = pe.at[:, 1::2].set(jnp.cos(angles))
    return pe[:, None, :].astype(dtype)                                       # (L, 1, D)


def _pe_add_kernel(x_ref, pe_ref, o_ref):
    # dense path   : x/o (tile_s, B, D), pe (tile_s, 1, D) -> VPU broadcast over B
    # squeezed path: x/o (tile_s, D),    pe (tile_s, D)    -> plain add
    # astype is a no-op when dtypes already match; otherwise it handles the
    # promote-then-store case (e.g. bf16 x + f32 pe).
    o_ref[...] = (x_ref[...] + pe_ref[...]).astype(o_ref.dtype)


def _round_up(v: int, m: int) -> int:
    return ((v + m - 1) // m) * m


_SUBLANES_BY_ITEMSIZE = {4: 8, 2: 16, 1: 32}


def _vmem_budgets():
    """(live double-buffered block-bytes budget, vmem_limit_bytes, n_tensorcores)."""
    try:
        vmem_cap = int(pltpu.get_tpu_info().vmem_capacity_bytes)
    except Exception:
        vmem_cap = 64 * 1024 * 1024          # conservative (v7x-sized) fallback
    if vmem_cap >= 96 * 1024 * 1024:
        # v5e / v6e: 128 MiB VMEM, single TensorCore.
        return 56 * 1024 * 1024, 96 * 1024 * 1024, 1
    # v7x: 64 MiB VMEM per TC, 2 TensorCores; leave headroom for compiler scratch.
    return 40 * 1024 * 1024, 56 * 1024 * 1024, 2


def positional_encoding_forward(
    x: jnp.ndarray,
    pe: jnp.ndarray,
    *,
    block_bytes_budget: int | None = None,   # override live (double-buffered) block bytes
    vmem_limit_bytes: int | None = None,     # override Mosaic scoped-VMEM limit
    donate_x: bool = False,                  # alias x's HBM buffer to the output;
                                             # caller must NOT read x afterwards
) -> jnp.ndarray:
    """out = x + pe[:x.shape[0]]   with x (S, B, D), pe (max_len, 1, D)."""
    S, B, D = x.shape
    assert pe.ndim == 3 and pe.shape[1] == 1 and pe.shape[2] == D and pe.shape[0] >= S

    budget, limit, n_tc = _vmem_budgets()
    if block_bytes_budget is not None:
        budget = block_bytes_budget
    if vmem_limit_bytes is not None:
        limit = vmem_limit_bytes

    x_size = jnp.dtype(x.dtype).itemsize
    pe_size = jnp.dtype(pe.dtype).itemsize
    sub = _SUBLANES_BY_ITEMSIZE.get(x_size, 8)     # sublanes per vreg tile
    d_pad = _round_up(D, 128)                      # lane padding
    b_pad = _round_up(B, sub)                      # sublane padding of the (B, D) face

    # Double-buffered VMEM block bytes per sequence row (x + out + pe).
    dense_row_bytes = 2 * (2 * b_pad + sub) * d_pad * x_size
    squeezed_row_bytes = 2 * 3 * d_pad * x_size

    # Squeeze the batch axis out of the block only when it would otherwise pad
    # the sublane dim AND each per-row run stays long enough (>= 1 KiB) that the
    # resulting strided DMAs are still efficient.  Otherwise the dense path's
    # fully contiguous (tile_s, B, D) DMAs win — HBM bandwidth, not VMEM
    # padding, is the binding resource for this streaming add.
    use_squeezed = (B < sub) and (D * x_size >= 1024)

    row_bytes = squeezed_row_bytes if use_squeezed else dense_row_bytes
    tile_s = max(1, budget // row_bytes)
    if tile_s >= S:
        tile_s = S
        # On 2-TC chips (v7x) split into >= 4 sequence tiles (>= 2 per core) so
        # both cores get work and double buffering stays alive; skip on 1-TC chips.
        if n_tc > 1 and S >= 4 * sub:
            tile_s = _round_up(pl.cdiv(S, 4), sub)
    elif use_squeezed:
        # (8,128) rule on the squeezed (tile_s, D) block face.
        tile_s = max(sub, (tile_s // sub) * sub)

    n_seq = pl.cdiv(S, tile_s)

    if use_squeezed:
        grid = (n_seq, B)
        in_specs = [
            pl.BlockSpec((tile_s, None, D), lambda i, b: (i, b, 0)),   # x  -> (tile_s, D)
            pl.BlockSpec((tile_s, None, D), lambda i, b: (i, 0, 0)),   # pe -> (tile_s, D)
        ]
        out_specs = pl.BlockSpec((tile_s, None, D), lambda i, b: (i, b, 0))
        # Batch axis "arbitrary": megacore shards only the sequence axis, and pe
        # (whose block index is independent of b) is fetched once per seq tile.
        dims = ("parallel", "arbitrary")
    else:
        grid = (n_seq,)
        in_specs = [
            pl.BlockSpec((tile_s, B, D), lambda i: (i, 0, 0)),         # x
            pl.BlockSpec((tile_s, 1, D), lambda i: (i, 0, 0)),         # pe (full table; only
        ]                                                              #  blocks < n_seq touched)
        out_specs = pl.BlockSpec((tile_s, B, D), lambda i: (i, 0, 0))
        dims = ("parallel",)

    cost = pl.CostEstimate(
        flops=S * B * D,
        transcendentals=0,
        bytes_accessed=2 * S * B * D * x_size + S * D * pe_size,
    )

    return pl.pallas_call(
        _pe_add_kernel,
        out_shape=jax.ShapeDtypeStruct((S, B, D), x.dtype),
        grid_spec=pltpu.PrefetchScalarGridSpec(
            num_scalar_prefetch=0,
            grid=grid,
            in_specs=in_specs,
            out_specs=out_specs,
        ),
        compiler_params=pltpu.CompilerParams(
            dimension_semantics=dims,
            vmem_limit_bytes=limit,
        ),
        cost_estimate=cost,
        input_output_aliases=({0: 0} if donate_x else {}),
    )(x, pe)


if __name__ == "__main__":
    # Small shapes consistent with the module's (seq, batch, d_model) forward.
    seq_len, batch, d_model = 8, 2, 32
    max_len = 64  # module default is 5000; only pe[:seq_len] is ever read

    key0, key1, key2 = jax.random.split(jax.random.PRNGKey(0), 3)

    # Table built once, in the activation dtype — passed to the kernel unsliced.
    pe = _build_pe(d_model, max_len=max_len, dtype=jnp.float32)

    # Small-batch / small-D shape: stays on the dense (tile_s, B, D) path.
    x = jax.random.normal(key0, (seq_len, batch, d_model), dtype=jnp.float32)
    out = jax.block_until_ready(positional_encoding_forward(x, pe))
    ref = x + pe[:seq_len]
    assert out.shape == x.shape and out.dtype == x.dtype
    assert jnp.allclose(out, ref, atol=1e-6), "mismatch vs reference (dense small-B path)"

    # Dense-batch path: B=8 fills the sublanes exactly.
    x2 = jax.random.normal(key1, (seq_len, 8, d_model), dtype=jnp.float32)
    out2 = jax.block_until_ready(positional_encoding_forward(x2, pe))
    assert jnp.allclose(out2, x2 + pe[:seq_len], atol=1e-6), "mismatch (dense B=8 path)"

    # Squeezed-batch path: B=2 < 8 sublanes and D*itemsize = 1 KiB contiguous runs.
    d_big, seq_big = 256, 16
    pe_big = _build_pe(d_big, max_len=max_len, dtype=jnp.float32)
    x3 = jax.random.normal(key2, (seq_big, 2, d_big), dtype=jnp.float32)
    out3 = jax.block_until_ready(positional_encoding_forward(x3, pe_big))
    assert jnp.allclose(out3, x3 + pe_big[:seq_big], atol=1e-6), "mismatch (squeezed path)"

    print("KERNEL_OK")
</pallas_src>

<mosaic_0001>
module attributes {stable_mosaic.version = 11 : i64} {
  func.func @_pe_add_kernel(%arg0: i32, %arg1: memref<8x2x32xf32, #tpu.memory_space<vmem>>, %arg2: memref<8x1x32xf32, #tpu.memory_space<vmem>>, %arg3: memref<8x2x32xf32, #tpu.memory_space<vmem>>) attributes {dimension_semantics = [#tpu.dimension_semantics<parallel>], iteration_bounds = array<i64: 1>, scalar_prefetch = 0 : i64, scratch_operands = 0 : i64, tpu.core_type = #tpu.core_type<tc>, window_params = [{transform_indices = @transform_0, window_bounds = array<i64: 8, 2, 32>}, {transform_indices = @transform_1, window_bounds = array<i64: 8, 1, 32>}, {transform_indices = @transform_2, window_bounds = array<i64: 8, 2, 32>}]} {
    %c0 = arith.constant 0 : index
    %c0_0 = arith.constant 0 : index
    %c0_1 = arith.constant 0 : index
    %0 = vector.load %arg1[%c0, %c0_0, %c0_1] : memref<8x2x32xf32, #tpu.memory_space<vmem>>, vector<8x2x32xf32>
    %c0_2 = arith.constant 0 : index
    %c0_3 = arith.constant 0 : index
    %c0_4 = arith.constant 0 : index
    %1 = vector.load %arg2[%c0_2, %c0_3, %c0_4] : memref<8x1x32xf32, #tpu.memory_space<vmem>>, vector<8x1x32xf32>
    %2 = vector.broadcast %1 : vector<8x1x32xf32> to vector<8x2x32xf32>
    %3 = arith.addf %0, %2 : vector<8x2x32xf32>
    %c0_5 = arith.constant 0 : index
    %c0_6 = arith.constant 0 : index
    %c0_7 = arith.constant 0 : index
    %4 = vector.load %arg3[%c0_5, %c0_6, %c0_7] : memref<8x2x32xf32, #tpu.memory_space<vmem>>, vector<8x2x32xf32>
    tpu.vector_store %arg3[%c0_5, %c0_6, %c0_7], %3 {strides = array<i32>} : memref<8x2x32xf32, #tpu.memory_space<vmem>>, vector<8x2x32xf32>,
    return
  }
  func.func @transform_0(%arg0: i32) -> (i32, i32, i32) {
    %c0_i32 = arith.constant 0 : i32
    %c0_i32_0 = arith.constant 0 : i32
    %c0_i32_1 = arith.constant 0 : i32
    return %arg0, %c0_i32, %c0_i32_0 : i32, i32, i32
  }
  func.func @transform_1(%arg0: i32) -> (i32, i32, i32) {
    %c0_i32 = arith.constant 0 : i32
    %c0_i32_0 = arith.constant 0 : i32
    %c0_i32_1 = arith.constant 0 : i32
    return %arg0, %c0_i32, %c0_i32_0 : i32, i32, i32
  }
  func.func @transform_2(%arg0: i32) -> (i32, i32, i32) {
    %c0_i32 = arith.constant 0 : i32
    %c0_i32_0 = arith.constant 0 : i32
    %c0_i32_1 = arith.constant 0 : i32
    return %arg0, %c0_i32, %c0_i32_0 : i32, i32, i32
  }
}

</mosaic_0001>

<llo_original>
// kernel: tpu_custom_call.1
$region0: #{tpu_custom_call.1}
  #allocation0 [shape = 'u32[]', space=smem, size = 0x4, offset = 0x4, fixed_abs, tag = 'smem constant byte address 0x4 - core index']
  #allocation1 [shape = 'u32[72,128]{1,0:T(1,128)}', space=vmem, size = 0x9000, scoped, tag = 'internal scratch']
  %s0 = inlined_call_operand.vmem [shape: f32[8,2,32], index: 0, kind: input, shape index: {}]
  %s1 = inlined_call_operand.vmem [shape: f32[64,1,32], index: 1, kind: input, shape index: {}]
  %s2 = inlined_call_operand.hbm [shape: f32[8,2,32], index: 2, kind: output, shape index: {}]
  %s3 = sld [smem:[#allocation0]]
  $region18: #{tpu_custom_call.1} parent=0
    _
  %s5 = ssub.s32 1, %s3
  %s6 = scalar_select 0, %s5, %s3
  $region1: #{tpu_custom_call.1} parent=0
    #allocation2 [shape = 'u8[8192]{0}', space=vmem, size = 0x2000, scoped, tag = 'output window, operand 0, single buffered']
    #allocation3 [shape = 's32[1]{0}', space=sflag, size = 0x4, scoped, tag = 'scoped memory for tpu_custom_call.1']
    %7 = vsyncpa [#allocation3], 0
    // Predicated region
    $region2: #{tpu_custom_call.1} parent=1 // pred_check
      _
    $region3: #{tpu_custom_call.1} parent=1 // pred_check_branch
      %9 = sbr.rel (0) target = $region5
    $region4: #{tpu_custom_call.1} parent=1 // pred_region
      _
    $region5: #{tpu_custom_call.1} parent=1 // pred_fallthru
      _
    // Predicated region
    $region6: #{tpu_custom_call.1} parent=1 // pred_check
      _
    $region7: #{tpu_custom_call.1} parent=1 // pred_check_branch
      %11 = sbr.rel (0) target = $region9
    $region8: #{tpu_custom_call.1} parent=1 // pred_region
      _
    $region9: #{tpu_custom_call.1} parent=1 // pred_fallthru
      _
    %v12 = vld [vmem:[%s0] sm:$0x3]
    %v13 = vld [vmem:[%s0 + $0x2] sm:$0x3]
    %v14 = vld [vmem:[%s0 + $0x4] sm:$0x3]
    %v15 = vld [vmem:[%s0 + $0x6] sm:$0x3]
    %v16 = vld [vmem:[%s0 + $0x8] sm:$0x3]
    %v17 = vld [vmem:[%s0 + $0xa] sm:$0x3]
    %v18 = vld [vmem:[%s0 + $0xc] sm:$0x3]
    %v19 = vld [vmem:[%s0 + $0xe] sm:$0x3]
    %v20 = vld [vmem:[%s1] sm:$0x1]
    %v21 = vld [vmem:[%s1 + $0x1] sm:$0x1]
    %v22 = vld [vmem:[%s1 + $0x2] sm:$0x1]
    %v23 = vld [vmem:[%s1 + $0x3] sm:$0x1]
    %v24 = vld [vmem:[%s1 + $0x4] sm:$0x1]
    %v25 = vld [vmem:[%s1 + $0x5] sm:$0x1]
    %v26 = vld [vmem:[%s1 + $0x6] sm:$0x1]
    %v27 = vld [vmem:[%s1 + $0x7] sm:$0x1]
    %v36 = vperm.slane %v20, 0
    %v37 = vperm.slane %v21, 0
    %v38 = vperm.slane %v22, 0
    %v39 = vperm.slane %v23, 0
    %v40 = vperm.slane %v24, 0
    %v41 = vperm.slane %v25, 0
    %v42 = vperm.slane %v26, 0
    %v43 = vperm.slane %v27, 0
    %v52 = vadd.f32 %v12, %v36
    %v53 = vadd.f32 %v13, %v37
    %v54 = vadd.f32 %v14, %v38
    %v55 = vadd.f32 %v15, %v39
    %v56 = vadd.f32 %v16, %v40
    %v57 = vadd.f32 %v17, %v41
    %v58 = vadd.f32 %v18, %v42
    %v59 = vadd.f32 %v19, %v43
    %vm60 = vcmask 254976
    %61 = vst.msk [vmem:[#allocation2] sm:$0x3] %vm60, %v52
    %62 = vst.msk [vmem:[#allocation2 + $0x2] sm:$0x3] %vm60, %v53
    %63 = vst.msk [vmem:[#allocation2 + $0x4] sm:$0x3] %vm60, %v54
    %64 = vst.msk [vmem:[#allocation2 + $0x6] sm:$0x3] %vm60, %v55
    %65 = vst.msk [vmem:[#allocation2 + $0x8] sm:$0x3] %vm60, %v56
    %66 = vst.msk [vmem:[#allocation2 + $0xa] sm:$0x3] %vm60, %v57
    %67 = vst.msk [vmem:[#allocation2 + $0xc] sm:$0x3] %vm60, %v58
    %68 = vst.msk [vmem:[#allocation2 + $0xe] sm:$0x3] %vm60, %v59
    // Predicated region
    $region10: #{tpu_custom_call.1} parent=1 // pred_check
      _
    $region11: #{tpu_custom_call.1} parent=1 // pred_check_branch
      %70 = sbr.rel (0) target = $region13
    $region12: #{tpu_custom_call.1} parent=1 // pred_region
      %72 = vsyncadd [#allocation3], 0
      %s73 = sshll.u32 [#allocation2], 4
      %s74 = int_to_ptr.vmem [resolvable:$true] %s73
      %s75 = sshll.u32 %s2, 4
      %s76 = int_to_ptr.hbm [resolvable:$true] %s75
      %81 = dma.vmem_to_hbm [thread:$0]  %s74, 256, %s76, [#allocation3], 32, 32, 2
    $region13: #{tpu_custom_call.1} parent=1 // pred_fallthru
      _
    // Predicated region
    $region14: #{tpu_custom_call.1} parent=1 // pred_check
      _
    $region15: #{tpu_custom_call.1} parent=1 // pred_check_branch
      %83 = sbr.rel (0) target = $region17
    $region16: #{tpu_custom_call.1} parent=1 // pred_region
      %85 = dma.done [#allocation3], 256
    $region17: #{tpu_custom_call.1} parent=1 // pred_fallthru
      _
    %86 = vsyncpa [#allocation3], 1

</llo_original>
